<compile_context>
chip_gen: v6e
topology: v6e:2x2x1
jax: 0.10.0
libtpu: 0.0.40
codegen_flags: <defaults>
</compile_context>

<pallas_src>
import math

import jax
import jax.numpy as jnp
from jax.experimental import pallas as pl
from jax.experimental.pallas import tpu as pltpu

NEG_SLOPE = 0.01      # nn.LeakyReLU default negative_slope
BN_EPS = 1e-5         # nn.BatchNorm1d default eps


# ---- Pallas kernel ---------------------------------------------------------
def _basic_block_kernel(x_ref, w_ref, t_ref, out_ref):
    """x_ref:(bm,H)  w_ref:(2,H,H) pre-transposed, BN-scale-folded  t_ref:(2,H)."""
    x = x_ref[...]                                    # (bm, H) f32

    def lrelu(v):
        return jnp.where(v >= 0, v, NEG_SLOPE * v)

    t1 = t_ref[0:1, :]                                # (1, H) fused bias + BN shift
    t2 = t_ref[1:2, :]
    cdt = w_ref.dtype                                 # MXU input dtype (f32/bf16)

    # layer 1: linear (BN scale already folded into the weights) -> shift -> act
    h = jnp.dot(x.astype(cdt), w_ref[0], preferred_element_type=jnp.float32)
    h = lrelu(h + t1)
    # layer 2
    h = jnp.dot(h.astype(cdt), w_ref[1], preferred_element_type=jnp.float32)
    h = lrelu(h + t2)
    # residual + act, one dense full-tile store
    out_ref[...] = lrelu(h + x).astype(out_ref.dtype)


# ---- tiling / VMEM sizing ---------------------------------------------------
def _vmem_capacity_bytes():
    try:
        return int(pltpu.get_tpu_info().vmem_capacity_bytes)
    except Exception:
        return 64 * 1024 * 1024           # conservative fallback (v7x per-TC VMEM)


def _const_spec(shape):
    """BlockSpec for a grid-invariant operand: resident, single-buffered."""
    index_map = lambda i: (0,) * len(shape)
    try:
        return pl.BlockSpec(shape, index_map, pipeline_mode=pl.Buffered(1))
    except Exception:                      # older API without pipeline_mode
        return pl.BlockSpec(shape, index_map)


def _choose_batch_tiling(B, H, compute_bytes):
    """Returns (bm, n_tiles, vmem_limit). bm is a multiple of 8."""
    capacity = _vmem_capacity_bytes()
    budget = int(min(0.6 * capacity, 48 * 1024 * 1024))
    const_bytes = 2 * H * H * compute_bytes + 2 * H * 4      # single-buffered consts
    per_row = (2 + 2) * H * 4 + H * 4     # x + out double-buffered + ~1x f32 temps
    bm_cap = max(8, ((budget - const_bytes) // per_row) // 8 * 8)
    target = max(8, min(512, bm_cap))     # ~512-row tiles are near the HBM roofline
    n_tiles = pl.cdiv(B, target)
    if B > 256:
        n_tiles = max(2, n_tiles)         # keep the DMA/compute pipeline overlapped
        n_tiles += n_tiles % 2            # even tile count -> shardable on v7x's 2 TCs
    bm = 8 * pl.cdiv(pl.cdiv(B, 8), n_tiles)   # < 8 padded rows per tile
    vmem_limit = int(min(0.9 * capacity, 96 * 1024 * 1024))
    return bm, n_tiles, vmem_limit


# ---- wrapper ----------------------------------------------------------------
def basic_block_forward(x, params, *, bm=None, compute_dtype=jnp.float32):
    """x: (B, hidden) f32; params: PyTorch-layout tensors. Returns (B, hidden).

    compute_dtype controls the MXU input dtype (accumulation stays f32);
    jnp.bfloat16 halves matmul traffic on v6e/v7x at a small accuracy cost.
    """
    B, H = x.shape

    # Fold eval-mode BatchNorm into each Linear (one-time, on constants):
    #   y = x @ (W.T * s) + (s * (b - running_mean) + beta),  s = g/sqrt(rv+eps)
    def fold(w, b, g, beta, rm, rv):
        s = g / jnp.sqrt(rv + BN_EPS)
        wt = (w * s[:, None]).T             # (in, out): BN scale folded into weights
        t = s * (b - rm) + beta             # fused linear-bias + BN shift
        return wt, t

    w1t, t1 = fold(params["w1"], params["b1"], params["g1"], params["beta1"],
                   params["rm1"], params["rv1"])
    w2t, t2 = fold(params["w2"], params["b2"], params["g2"], params["beta2"],
                   params["rm2"], params["rv2"])
    w_stack = jnp.stack([w1t, w2t], axis=0).astype(compute_dtype)   # (2, H, H)
    t_stack = jnp.stack([t1, t2], axis=0).astype(jnp.float32)       # (2, H)

    compute_bytes = jnp.dtype(compute_dtype).itemsize
    auto_bm, auto_tiles, vmem_limit = _choose_batch_tiling(B, H, compute_bytes)
    if bm is None:
        bm, n_tiles = auto_bm, auto_tiles
    else:
        n_tiles = pl.cdiv(B, bm)

    Bp = n_tiles * bm
    xp = x if Bp == B else jnp.pad(x, ((0, Bp - B), (0, 0)))   # <8 rows pad per tile

    out = pl.pallas_call(
        _basic_block_kernel,
        out_shape=jax.ShapeDtypeStruct((Bp, H), x.dtype),
        grid=(n_tiles,),
        in_specs=[
            pl.BlockSpec((bm, H), lambda i: (i, 0)),   # activations: tiled over rows
            _const_spec((2, H, H)),                    # folded weights (resident)
            _const_spec((2, H)),                       # fused shifts (resident)
        ],
        out_specs=pl.BlockSpec((bm, H), lambda i: (i, 0)),
        compiler_params=pltpu.CompilerParams(
            dimension_semantics=("parallel",),
            vmem_limit_bytes=vmem_limit),
    )(xp, w_stack, t_stack)

    return out if Bp == B else out[:B]


# ---- deterministic parameter init (PyTorch-style) ---------------------------
def init_params(key, hidden):
    bound = 1.0 / math.sqrt(hidden)
    ks = jax.random.split(key, 12)
    p = {}
    p["w1"] = jax.random.uniform(ks[0], (hidden, hidden), jnp.float32, -bound, bound)
    p["b1"] = jax.random.uniform(ks[1], (hidden,), jnp.float32, -bound, bound)
    p["w2"] = jax.random.uniform(ks[2], (hidden, hidden), jnp.float32, -bound, bound)
    p["b2"] = jax.random.uniform(ks[3], (hidden,), jnp.float32, -bound, bound)
    # non-trivial eval-mode BatchNorm state so the affine actually does work
    p["g1"] = 1.0 + 0.1 * jax.random.normal(ks[4], (hidden,), jnp.float32)
    p["beta1"] = 0.1 * jax.random.normal(ks[5], (hidden,), jnp.float32)
    p["rm1"] = 0.1 * jax.random.normal(ks[6], (hidden,), jnp.float32)
    p["rv1"] = jax.random.uniform(ks[7], (hidden,), jnp.float32, 0.5, 1.5)
    p["g2"] = 1.0 + 0.1 * jax.random.normal(ks[8], (hidden,), jnp.float32)
    p["beta2"] = 0.1 * jax.random.normal(ks[9], (hidden,), jnp.float32)
    p["rm2"] = 0.1 * jax.random.normal(ks[10], (hidden,), jnp.float32)
    p["rv2"] = jax.random.uniform(ks[11], (hidden,), jnp.float32, 0.5, 1.5)
    return p


# ---- pure-JAX reference for verification ------------------------------------
def reference_forward(x, p):
    def lrelu(v):
        return jnp.where(v >= 0, v, NEG_SLOPE * v)

    def bn(z, g, beta, rm, rv):
        return (z - rm) / jnp.sqrt(rv + BN_EPS) * g + beta

    out = lrelu(bn(x @ p["w1"].T + p["b1"], p["g1"], p["beta1"], p["rm1"], p["rv1"]))
    out = lrelu(bn(out @ p["w2"].T + p["b2"], p["g2"], p["beta2"], p["rm2"], p["rv2"]))
    return lrelu(out + x)


if __name__ == "__main__":
    key = jax.random.PRNGKey(0)
    kp, kx1, kx2 = jax.random.split(key, 3)

    HIDDEN = 32
    params = init_params(kp, HIDDEN)

    # primary small smoke test (single tile)
    B = 16
    x = jax.random.normal(kx1, (B, HIDDEN), jnp.float32)
    out = jax.block_until_ready(basic_block_forward(x, params))
    ref = reference_forward(x, params)
    assert out.shape == (B, HIDDEN), out.shape
    if not jnp.allclose(out, ref, rtol=1e-4, atol=1e-5):
        raise AssertionError(
            f"mismatch vs reference, max abs err={jnp.max(jnp.abs(out - ref))}")

    # second check: multi-tile grid + ragged batch padding path
    B2 = 260
    x2 = jax.random.normal(kx2, (B2, HIDDEN), jnp.float32)
    out2 = jax.block_until_ready(basic_block_forward(x2, params))
    ref2 = reference_forward(x2, params)
    assert out2.shape == (B2, HIDDEN), out2.shape
    if not jnp.allclose(out2, ref2, rtol=1e-4, atol=1e-5):
        raise AssertionError(
            f"mismatch vs reference (multi-tile), "
            f"max abs err={jnp.max(jnp.abs(out2 - ref2))}")

    print("KERNEL_OK")
</pallas_src>

<mosaic_0001>
module attributes {stable_mosaic.version = 11 : i64} {
  func.func @_basic_block_kernel(%arg0: i32, %arg1: memref<16x32xf32, #tpu.memory_space<vmem>>, %arg2: memref<2x32x32xf32, #tpu.memory_space<vmem>>, %arg3: memref<2x32xf32, #tpu.memory_space<vmem>>, %arg4: memref<16x32xf32, #tpu.memory_space<vmem>>) attributes {dimension_semantics = [#tpu.dimension_semantics<parallel>], iteration_bounds = array<i64: 1>, scalar_prefetch = 0 : i64, scratch_operands = 0 : i64, tpu.core_type = #tpu.core_type<tc>, window_params = [{transform_indices = @transform_0, window_bounds = array<i64: 16, 32>}, {pipeline_mode = #tpu.pipeline_mode<synchronous>, transform_indices = @transform_1, window_bounds = array<i64: 2, 32, 32>}, {pipeline_mode = #tpu.pipeline_mode<synchronous>, transform_indices = @transform_2, window_bounds = array<i64: 2, 32>}, {transform_indices = @transform_3, window_bounds = array<i64: 16, 32>}]} {
    %c0 = arith.constant 0 : index
    %c0_0 = arith.constant 0 : index
    %0 = vector.load %arg1[%c0, %c0_0] : memref<16x32xf32, #tpu.memory_space<vmem>>, vector<16x32xf32>
    %c0_1 = arith.constant 0 : index
    %c0_2 = arith.constant 0 : index
    %1 = vector.load %arg3[%c0_1, %c0_2] : memref<2x32xf32, #tpu.memory_space<vmem>>, vector<1x32xf32>
    %c1 = arith.constant 1 : index
    %c0_3 = arith.constant 0 : index
    %2 = vector.load %arg3[%c1, %c0_3] : memref<2x32xf32, #tpu.memory_space<vmem>>, vector<1x32xf32>
    %c0_4 = arith.constant 0 : index
    %c0_5 = arith.constant 0 : index
    %c0_6 = arith.constant 0 : index
    %3 = vector.load %arg2[%c0_4, %c0_5, %c0_6] : memref<2x32x32xf32, #tpu.memory_space<vmem>>, vector<1x32x32xf32>
    %4 = vector.shape_cast %3 : vector<1x32x32xf32> to vector<32x32xf32>
    %cst = arith.constant dense<0.000000e+00> : vector<16x32xf32>
    %5 = tpu.matmul %0, %4, %cst {dimension_numbers = #tpu.dot_dimension_numbers<[1], [0], [0], [1], [0, 0, 1, 1], [], []>} : vector<16x32xf32>, vector<32x32xf32>, vector<16x32xf32> -> vector<16x32xf32>
    %6 = vector.broadcast %1 : vector<1x32xf32> to vector<16x32xf32>
    %7 = arith.addf %5, %6 : vector<16x32xf32>
    %cst_7 = arith.constant 0.000000e+00 : f32
    %8 = vector.broadcast %cst_7 : f32 to vector<16x32xf32>
    %9 = arith.cmpf oge, %7, %8 : vector<16x32xf32>
    %cst_8 = arith.constant 0.00999999977 : f32
    %10 = vector.broadcast %cst_8 : f32 to vector<16x32xf32>
    %11 = arith.mulf %10, %7 : vector<16x32xf32>
    %12 = arith.select %9, %7, %11 : vector<16x32xi1>, vector<16x32xf32>
    %c1_9 = arith.constant 1 : index
    %c0_10 = arith.constant 0 : index
    %c0_11 = arith.constant 0 : index
    %13 = vector.load %arg2[%c1_9, %c0_10, %c0_11] : memref<2x32x32xf32, #tpu.memory_space<vmem>>, vector<1x32x32xf32>
    %14 = vector.shape_cast %13 : vector<1x32x32xf32> to vector<32x32xf32>
    %cst_12 = arith.constant dense<0.000000e+00> : vector<16x32xf32>
    %15 = tpu.matmul %12, %14, %cst_12 {dimension_numbers = #tpu.dot_dimension_numbers<[1], [0], [0], [1], [0, 0, 1, 1], [], []>} : vector<16x32xf32>, vector<32x32xf32>, vector<16x32xf32> -> vector<16x32xf32>
    %16 = vector.broadcast %2 : vector<1x32xf32> to vector<16x32xf32>
    %17 = arith.addf %15, %16 : vector<16x32xf32>
    %cst_13 = arith.constant 0.000000e+00 : f32
    %18 = vector.broadcast %cst_13 : f32 to vector<16x32xf32>
    %19 = arith.cmpf oge, %17, %18 : vector<16x32xf32>
    %cst_14 = arith.constant 0.00999999977 : f32
    %20 = vector.broadcast %cst_14 : f32 to vector<16x32xf32>
    %21 = arith.mulf %20, %17 : vector<16x32xf32>
    %22 = arith.select %19, %17, %21 : vector<16x32xi1>, vector<16x32xf32>
    %23 = arith.addf %22, %0 : vector<16x32xf32>
    %cst_15 = arith.constant 0.000000e+00 : f32
    %24 = vector.broadcast %cst_15 : f32 to vector<16x32xf32>
    %25 = arith.cmpf oge, %23, %24 : vector<16x32xf32>
    %cst_16 = arith.constant 0.00999999977 : f32
    %26 = vector.broadcast %cst_16 : f32 to vector<16x32xf32>
    %27 = arith.mulf %26, %23 : vector<16x32xf32>
    %28 = arith.select %25, %23, %27 : vector<16x32xi1>, vector<16x32xf32>
    %c0_17 = arith.constant 0 : index
    %c0_18 = arith.constant 0 : index
    %29 = vector.load %arg4[%c0_17, %c0_18] : memref<16x32xf32, #tpu.memory_space<vmem>>, vector<16x32xf32>
    tpu.vector_store %arg4[%c0_17, %c0_18], %28 {strides = array<i32>} : memref<16x32xf32, #tpu.memory_space<vmem>>, vector<16x32xf32>,
    return
  }
  func.func @transform_0(%arg0: i32) -> (i32, i32) {
    %c0_i32 = arith.constant 0 : i32
    %c0_i32_0 = arith.constant 0 : i32
    return %arg0, %c0_i32 : i32, i32
  }
  func.func @transform_1(%arg0: i32) -> (i32, i32, i32) {
    %c0_i32 = arith.constant 0 : i32
    %c0_i32_0 = arith.constant 0 : i32
    %c0_i32_1 = arith.constant 0 : i32
    %c0_i32_2 = arith.constant 0 : i32
    return %c0_i32, %c0_i32_0, %c0_i32_1 : i32, i32, i32
  }
  func.func @transform_2(%arg0: i32) -> (i32, i32) {
    %c0_i32 = arith.constant 0 : i32
    %c0_i32_0 = arith.constant 0 : i32
    %c0_i32_1 = arith.constant 0 : i32
    return %c0_i32, %c0_i32_0 : i32, i32
  }
  func.func @transform_3(%arg0: i32) -> (i32, i32) {
    %c0_i32 = arith.constant 0 : i32
    %c0_i32_0 = arith.constant 0 : i32
    return %arg0, %c0_i32 : i32, i32
  }
}

</mosaic_0001>

<llo_original>
// kernel: tpu_custom_call.1
$region0: #{tpu_custom_call.1}
  #allocation0 [shape = 'u32[]', space=smem, size = 0x4, offset = 0x4, fixed_abs, tag = 'smem constant byte address 0x4 - core index']
  #allocation1 [shape = 'u32[144,128]{1,0:T(1,128)}', space=vmem, size = 0x12000, scoped, tag = 'internal scratch']
  %s0 = inlined_call_operand.hbm [shape: f32[16,32], index: 0, kind: input, shape index: {}]
  %s1 = inlined_call_operand.hbm [shape: f32[2,32,32], index: 1, kind: input, shape index: {}]
  %s2 = inlined_call_operand.vmem [shape: f32[2,32], index: 2, kind: input, shape index: {}]
  %s3 = inlined_call_operand.hbm [shape: f32[16,32], index: 3, kind: output, shape index: {}]
  %s4 = sld [smem:[#allocation0]]
  $region30: #{tpu_custom_call.1} parent=0
    _
  %s6 = ssub.s32 1, %s4
  %s7 = scalar_select 0, %s6, %s4
  $region1: #{tpu_custom_call.1} parent=0
    #allocation2 [shape = 'u8[8192]{0}', space=vmem, size = 0x2000, scoped, tag = 'input window, operand 0, single buffered']
    #allocation3 [shape = 's32[1]{0}', space=sflag, size = 0x4, scoped, tag = 'scoped memory for tpu_custom_call.1']
    #allocation4 [shape = 's32[1]{0}', space=sflag, size = 0x4, scoped, tag = 'scoped memory for tpu_custom_call.1']
    #allocation5 [shape = 'u8[32768]{0}', space=vmem, size = 0x8000, scoped, tag = 'input window, operand 1, single buffered']
    #allocation6 [shape = 's32[1]{0}', space=sflag, size = 0x4, scoped, tag = 'scoped memory for tpu_custom_call.1']
    #allocation7 [shape = 'u8[8192]{0}', space=vmem, size = 0x2000, scoped, tag = 'output window, operand 0, single buffered']
    %8 = vsyncpa [#allocation3], 0
    %9 = vsyncpa [#allocation6], 0
    %10 = vsyncpa [#allocation4], 0
    // Predicated region
    $region2: #{tpu_custom_call.1} parent=1 // pred_check
      _
    $region3: #{tpu_custom_call.1} parent=1 // pred_check_branch
      %12 = sbr.rel (0) target = $region5
    $region4: #{tpu_custom_call.1} parent=1 // pred_region
      %s14 = ssub.s32 256, 256
      %15 = vsyncadd [#allocation3], %s14
      %s16 = sshll.u32 [#allocation2], 4
      %s17 = int_to_ptr.vmem [resolvable:$true] %s16
      %22 = dma.hbm_to_vmem [thread:$0]  %s0, 256, %s17, [#allocation3], 128, 128, 8
    $region5: #{tpu_custom_call.1} parent=1 // pred_fallthru
      _
    // Predicated region
    $region6: #{tpu_custom_call.1} parent=1 // pred_check
      _
    $region7: #{tpu_custom_call.1} parent=1 // pred_check_branch
      %24 = sbr.rel (0) target = $region9
    $region8: #{tpu_custom_call.1} parent=1 // pred_region
      %s26 = ssub.s32 1024, 1024
      %27 = vsyncadd [#allocation6], %s26
      %s28 = sshll.u32 [#allocation5], 4
      %s29 = int_to_ptr.vmem [resolvable:$true] %s28
      %34 = dma.hbm_to_vmem [thread:$0]  %s1, 1024, %s29, [#allocation6], 128, 128, 8
    $region9: #{tpu_custom_call.1} parent=1 // pred_fallthru
      _
    // Predicated region
    $region10: #{tpu_custom_call.1} parent=1 // pred_check
      _
    $region11: #{tpu_custom_call.1} parent=1 // pred_check_branch
      %36 = sbr.rel (0) target = $region13
    $region12: #{tpu_custom_call.1} parent=1 // pred_region
      _
    $region13: #{tpu_custom_call.1} parent=1 // pred_fallthru
      _
    // Predicated region
    $region14: #{tpu_custom_call.1} parent=1 // pred_check
      _
    $region15: #{tpu_custom_call.1} parent=1 // pred_check_branch
      %38 = sbr.rel (0) target = $region17
    $region16: #{tpu_custom_call.1} parent=1 // pred_region
      %39 = dma.done [#allocation3], 256
    $region17: #{tpu_custom_call.1} parent=1 // pred_fallthru
      _
    // Predicated region
    $region18: #{tpu_custom_call.1} parent=1 // pred_check
      _
    $region19: #{tpu_custom_call.1} parent=1 // pred_check_branch
      %41 = sbr.rel (0) target = $region21
    $region20: #{tpu_custom_call.1} parent=1 // pred_region
      %42 = dma.done [#allocation6], 1024
    $region21: #{tpu_custom_call.1} parent=1 // pred_fallthru
      _
    %v43 = vld [vmem:[#allocation2] sm:$0xff]
    %v44 = vld [vmem:[#allocation2 + $0x8] sm:$0xff]
    %v45 = vld [vmem:[%s2] sm:$0x1]
    %v46 = vld [vmem:[%s2 + $0x1] sm:$0x1]
    %v47 = vld [vmem:[#allocation5] sm:$0xff]
    %v48 = vld [vmem:[#allocation5 + $0x8] sm:$0xff]
    %v49 = vld [vmem:[#allocation5 + $0x10] sm:$0xff]
    %v50 = vld [vmem:[#allocation5 + $0x18] sm:$0xff]
    %v51 = vlaneseq
    %v52 = vshrl.u32 %v51, 7
    %v53 = vsub.s32 0, %v52
    %v54 = vrot.slane %v45, %v53
    %vm55 = vcmask 261120
    %v57 = vsel %vm55, %v43, 0
    %v60 = vsel %vm55, %v44, 0
    %62 = vmatprep.subr.mxu0 0.0
    %63 = vmatpush1.msra.mxu0 0.0
    %64 = vmatprep.subr.mxu0 0.0
    %65 = vmatpush1.msra.mxu0 0.0
    %66 = vmatprep.subr.mxu0 0.0
    %67 = vmatpush1.msra.mxu0 0.0
    %68 = vmatprep.subr.mxu0 0.0
    %69 = vmatpush1.msra.mxu0 0.0
    %70 = vmatprep.subr.mxu0 0.0
    %71 = vmatpush1.msra.mxu0 0.0
    %72 = vmatprep.subr.mxu0 0.0
    %73 = vmatpush1.msra.mxu0 0.0
    %74 = vmatprep.subr.mxu0 0.0
    %75 = vmatpush1.msra.mxu0 0.0
    %76 = vmatprep.subr.mxu0 0.0
    %77 = vmatpush1.msra.mxu0 0.0
    %78 = vmatprep.subr.mxu0 0.0
    %79 = vmatpush1.msra.mxu0 0.0
    %80 = vmatprep.subr.mxu0 0.0
    %81 = vmatpush1.msra.mxu0 0.0
    %82 = vmatprep.subr.mxu0 0.0
    %83 = vmatpush1.msra.mxu0 0.0
    %84 = vmatprep.subr.mxu0 0.0
    %85 = vmatpush1.msra.mxu0 0.0
    %86 = vmatprep.subr.mxu0 0.0
    %87 = vmatpush1.msra.mxu0 %v50
    %88 = vmatprep.subr.mxu0 0.0
    %89 = vmatpush1.msra.mxu0 %v49
    %90 = vmatprep.subr.mxu0 0.0
    %91 = vmatpush1.msra.mxu0 %v48
    %92 = vmatprep.subr.mxu0 0.0
    %93 = vmatpush1.msra.mxu0 %v47
    %94 = vmatprep.subr.mxu0 0.0
    %95 = vmatpush2.msra.mxu0 0.0
    %96 = vmatprep.subr.mxu0 0.0
    %97 = vmatpush2.msra.mxu0 0.0
    %98 = vmatprep.subr.mxu0 0.0
    %99 = vmatpush2.msra.mxu0 0.0
    %100 = vmatprep.subr.mxu0 0.0
    %101 = vmatpush2.msra.mxu0 0.0
    %102 = vmatprep.subr.mxu0 0.0
    %103 = vmatpush2.msra.mxu0 0.0
    %104 = vmatprep.subr.mxu0 0.0
    %105 = vmatpush2.msra.mxu0 0.0
    %106 = vmatprep.subr.mxu0 0.0
    %107 = vmatpush2.msra.mxu0 0.0
    %108 = vmatprep.subr.mxu0 0.0
    %109 = vmatpush2.msra.mxu0 0.0
    %110 = vmatprep.subr.mxu0 0.0
    %111 = vmatpush2.msra.mxu0 0.0
    %112 = vmatprep.subr.mxu0 0.0
    %113 = vmatpush2.msra.mxu0 0.0
    %114 = vmatprep.subr.mxu0 0.0
    %115 = vmatpush2.msra.mxu0 0.0
    %116 = vmatprep.subr.mxu0 0.0
    %117 = vmatpush2.msra.mxu0 0.0
    %118 = vmatprep.subr.mxu0 0.0
    %119 = vmatpush2.msra.mxu0 0.0
    %120 = vmatprep.subr.mxu0 0.0
    %121 = vmatpush2.msra.mxu0 0.0
    %122 = vmatprep.subr.mxu0 0.0
    %123 = vmatpush2.msra.mxu0 0.0
    %124 = vmatprep.subr.mxu0 0.0
    %125 = vmatpush2.msra.mxu0 0.0
    %126 = vmatprep.mubr.f32.mxu0 0.0
    %127 = vmatmul.mubr.f32.gmra.mxu0 %v57
    %v128 = vpop.f32.mrf.mxu0
    %v129 = vadd.f32 %v54, %v128
    %v130 = vpop.f32.mrf.mxu0
    %131 = vmatprep.mubr.f32.mxu0 0.0
    %132 = vmatmul.mubr.f32.gmra.mxu0 %v60
    %v133 = vpop.f32.mrf.mxu0
    %v134 = vadd.f32 %v54, %v133
    %v135 = vpop.f32.mrf.mxu0
    %136 = vdwg.mxu0
    %vm137 = vcmp.ge.f32.partialorder %v129, 0.0
    %vm138 = vcmp.ge.f32.partialorder %v134, 0.0
    %v139 = vmul.f32 %v129, 0.01
    %v140 = vmul.f32 %v134, 0.01
    %v141 = vsel %vm137, %v129, %v139
    %v142 = vsel %vm138, %v134, %v140
    %s143 = scalar_lea.vmem [#allocation5], 32
    %v144 = vld [vmem:[%s143] sm:$0xff]
    %v145 = vld [vmem:[%s143 + $0x8] sm:$0xff]
    %v146 = vld [vmem:[%s143 + $0x10] sm:$0xff]
    %v147 = vld [vmem:[%s143 + $0x18] sm:$0xff]
    %v148 = vlaneseq
    %v149 = vshrl.u32 %v148, 7
    %v150 = vsub.s32 0, %v149
    %v151 = vrot.slane %v46, %v150
    %v153 = vsel %vm55, %v141, 0
    %v156 = vsel %vm55, %v142, 0
    %158 = vmatprep.subr.mxu0 0.0
    %159 = vmatpush1.msra.mxu0 0.0
    %160 = vmatprep.subr.mxu0 0.0
    %161 = vmatpush1.msra.mxu0 0.0
    %162 = vmatprep.subr.mxu0 0.0
    %163 = vmatpush1.msra.mxu0 0.0
    %164 = vmatprep.subr.mxu0 0.0
    %165 = vmatpush1.msra.mxu0 0.0
    %166 = vmatprep.subr.mxu0 0.0
    %167 = vmatpush1.msra.mxu0 0.0
    %168 = vmatprep.subr.mxu0 0.0
    %169 = vmatpush1.msra.mxu0 0.0
    %170 = vmatprep.subr.mxu0 0.0
    %171 = vmatpush1.msra.mxu0 0.0
    %172 = vmatprep.subr.mxu0 0.0
    %173 = vmatpush1.msra.mxu0 0.0
    %174 = vmatprep.subr.mxu0 0.0
    %175 = vmatpush1.msra.mxu0 0.0
    %176 = vmatprep.subr.mxu0 0.0
    %177 = vmatpush1.msra.mxu0 0.0
    %178 = vmatprep.subr.mxu0 0.0
    %179 = vmatpush1.msra.mxu0 0.0
    %180 = vmatprep.subr.mxu0 0.0
    %181 = vmatpush1.msra.mxu0 0.0
    %182 = vmatprep.subr.mxu0 0.0
    %183 = vmatpush1.msra.mxu0 %v147
    %184 = vmatprep.subr.mxu0 0.0
    %185 = vmatpush1.msra.mxu0 %v146
    %186 = vmatprep.subr.mxu0 0.0
    %187 = vmatpush1.msra.mxu0 %v145
    %188 = vmatprep.subr.mxu0 0.0
    %189 = vmatpush1.msra.mxu0 %v144
    %190 = vmatprep.subr.mxu0 0.0
    %191 = vmatpush2.msra.mxu0 0.0
    %192 = vmatprep.subr.mxu0 0.0
    %193 = vmatpush2.msra.mxu0 0.0
    %194 = vmatprep.subr.mxu0 0.0
    %195 = vmatpush2.msra.mxu0 0.0
    %196 = vmatprep.subr.mxu0 0.0
    %197 = vmatpush2.msra.mxu0 0.0
    %198 = vmatprep.subr.mxu0 0.0
    %199 = vmatpush2.msra.mxu0 0.0
    %200 = vmatprep.subr.mxu0 0.0
    %201 = vmatpush2.msra.mxu0 0.0
    %202 = vmatprep.subr.mxu0 0.0
    %203 = vmatpush2.msra.mxu0 0.0
    %204 = vmatprep.subr.mxu0 0.0
    %205 = vmatpush2.msra.mxu0 0.0
    %206 = vmatprep.subr.mxu0 0.0
    %207 = vmatpush2.msra.mxu0 0.0
    %208 = vmatprep.subr.mxu0 0.0
    %209 = vmatpush2.msra.mxu0 0.0
    %210 = vmatprep.subr.mxu0 0.0
    %211 = vmatpush2.msra.mxu0 0.0
    %212 = vmatprep.subr.mxu0 0.0
    %213 = vmatpush2.msra.mxu0 0.0
    %214 = vmatprep.subr.mxu0 0.0
    %215 = vmatpush2.msra.mxu0 0.0
    %216 = vmatprep.subr.mxu0 0.0
    %217 = vmatpush2.msra.mxu0 0.0
    %218 = vmatprep.subr.mxu0 0.0
    %219 = vmatpush2.msra.mxu0 0.0
    %220 = vmatprep.subr.mxu0 0.0
    %221 = vmatpush2.msra.mxu0 0.0
    %222 = vmatprep.mubr.f32.mxu0 0.0
    %223 = vmatmul.mubr.f32.gmra.mxu0 %v153
    %v224 = vpop.f32.mrf.mxu0
    %v225 = vadd.f32 %v151, %v224
    %v226 = vpop.f32.mrf.mxu0
    %227 = vmatprep.mubr.f32.mxu0 0.0
    %228 = vmatmul.mubr.f32.gmra.mxu0 %v156
    %v229 = vpop.f32.mrf.mxu0
    %v230 = vadd.f32 %v151, %v229
    %v231 = vpop.f32.mrf.mxu0
    %232 = vdwg.mxu0
    %vm233 = vcmp.ge.f32.partialorder %v225, 0.0
    %vm234 = vcmp.ge.f32.partialorder %v230, 0.0
    %v235 = vmul.f32 %v225, 0.01
    %v236 = vmul.f32 %v230, 0.01
    %v237 = vsel %vm233, %v225, %v235
    %v238 = vsel %vm234, %v230, %v236
    %v239 = vadd.f32 %v237, %v43
    %v240 = vadd.f32 %v238, %v44
    %vm241 = vcmp.ge.f32.partialorder %v239, 0.0
    %vm242 = vcmp.ge.f32.partialorder %v240, 0.0
    %v243 = vmul.f32 %v239, 0.01
    %v244 = vmul.f32 %v240, 0.01
    %v245 = vsel %vm241, %v239, %v243
    %v246 = vsel %vm242, %v240, %v244
    %247 = vst.msk [vmem:[#allocation7] sm:$0xff] %vm55, %v245
    %248 = vst.msk [vmem:[#allocation7 + $0x8] sm:$0xff] %vm55, %v246
    // Predicated region
    $region22: #{tpu_custom_call.1} parent=1 // pred_check
      _
    $region23: #{tpu_custom_call.1} parent=1 // pred_check_branch
      %250 = sbr.rel (0) target = $region25
    $region24: #{tpu_custom_call.1} parent=1 // pred_region
      %s252 = ssub.s32 256, 256
      %253 = vsyncadd [#allocation4], %s252
      %s254 = sshll.u32 [#allocation7], 4
      %s255 = int_to_ptr.vmem [resolvable:$true] %s254
      %260 = dma.vmem_to_hbm [thread:$0]  %s255, 256, %s3, [#allocation4], 128, 128, 8
    $region25: #{tpu_custom_call.1} parent=1 // pred_fallthru
      _
    // Predicated region
    $region26: #{tpu_custom_call.1} parent=1 // pred_check
      _
    $region27: #{tpu_custom_call.1} parent=1 // pred_check_branch
      %262 = sbr.rel (0) target = $region29
    $region28: #{tpu_custom_call.1} parent=1 // pred_region
      %263 = dma.done [#allocation4], 256
    $region29: #{tpu_custom_call.1} parent=1 // pred_fallthru
      _
    %264 = vsyncpa [#allocation3], 1
    %265 = vsyncpa [#allocation6], 1
    %266 = vsyncpa [#allocation4], 1

</llo_original>
